<compile_context>
chip_gen: v6e
topology: v6e:2x2x1
jax: 0.10.0
libtpu: 0.0.40
codegen_flags: <defaults>
</compile_context>

<pallas_src>
import functools
import math

import jax
import jax.numpy as jnp
from jax import lax
from jax.experimental import pallas as pl
from jax.experimental.pallas import tpu as pltpu


_INV_SQRT2 = 1.0 / math.sqrt(2.0)


def _gelu_exact(x):
    # PyTorch nn.GELU() default: 0.5*x*(1+erf(x/sqrt(2)))
    return 0.5 * x * (1.0 + lax.erf(x * _INV_SQRT2))


def _round_up(x, m):
    return (x + m - 1) // m * m


def mixffn_kernel(x_ref, w1_ref, dw_ref, bdw_ref, w2_ref, b2_ref,
                  nl_ref, nr_ref, o_ref, *, th, w):
    """One (batch, row-block) tile per grid step.

    x_ref  : ((H+2)*W, Cin+1) bf16  batch element's image, 1 zero row of halo
                                    padding top+bottom, plus a trailing
                                    "in-image flag" channel (1 inside, 0 on
                                    the padding rows).
    w1_ref : (Cin+1, Hp) bf16       fc1 weight; last row = fc1 bias (so halo
                                    rows give exactly 0 — conv zero padding).
    dw_ref : (9, Hp)  f32           depthwise 3x3 weights, row k = ki*3+kj
    bdw_ref: (1, Hp)  f32           depthwise bias
    w2_ref : (Hp, Cin) bf16         fc2 weight
    b2_ref : (1, Cin) f32           fc2 bias
    nl_ref : (TH*W, 1) f32          0 at column 0 of each image row, else 1
    nr_ref : (TH*W, 1) f32          0 at column W-1 of each image row, else 1
    o_ref  : (TH*W, Cin)            output tokens of this row block
    """
    r = pl.program_id(1)
    blk = th * w                              # tokens (pixels) per row block

    # ---- gather the TH+2 padded-image rows this block needs ---------------
    start = r * blk
    if blk % 8 == 0:
        start = pl.multiple_of(start, 8)
    xs = x_ref[pl.ds(start, (th + 2) * w), :]            # ((TH+2)*W, Cin+1)

    # ---- fc1 (1x1 conv) on the MXU, bf16 operands, f32 accumulate ---------
    # Bias and vertical zero padding are both handled by the flag channel /
    # last weight row: h == 0 exactly on out-of-image halo rows.
    h = jnp.dot(xs, w1_ref[...], preferred_element_type=jnp.float32)

    # ---- pe_conv: 3x3 depthwise, padding=1 (f32 on VPU/XLU) ----------------
    dw = dw_ref[...]
    hv0 = h[0 * w:0 * w + blk]                # image row i-1
    hv1 = h[1 * w:1 * w + blk]                # image row i
    hv2 = h[2 * w:2 * w + blk]                # image row i+1

    # Running accumulation: at most acc + one column-group temporary live.
    acc = hv0 * dw[1:2] + hv1 * dw[4:5] + hv2 * dw[7:8] + bdw_ref[...]
    c = hv0 * dw[0:1] + hv1 * dw[3:4] + hv2 * dw[6:7]    # taps at col j-1
    acc = acc + pltpu.roll(c, 1, 0) * nl_ref[...]        # shift +1, mask col 0
    c = hv0 * dw[2:3] + hv1 * dw[5:6] + hv2 * dw[8:9]    # taps at col j+1
    acc = acc + pltpu.roll(c, blk - 1, 0) * nr_ref[...]  # shift -1, mask col W-1

    # ---- activation (exact GELU); Dropout(p=0.0) is identity ---------------
    g = _gelu_exact(acc)

    # ---- fc2 (1x1 conv) on the MXU, bf16 operands, f32 accumulate ----------
    y = jnp.dot(g.astype(jnp.bfloat16), w2_ref[...],
                preferred_element_type=jnp.float32)
    o_ref[...] = (y + b2_ref[...]).astype(o_ref.dtype)


def mixffn_pallas(x, x_shape, params, *, row_tile=None, vmem_budget_frac=0.55):
    """x: (B, N, Cin) tokens, x_shape=(H, W). Returns (B, N, Cin)."""
    B, N, Cin = x.shape
    H, W = x_shape
    assert N == H * W
    Hid = params["w1"].shape[1]
    Hp = _round_up(Hid, 128)              # lane-dense hidden dim for the MXU

    # ---- per-generation VMEM capacity (128 MiB v5e/v6e, 64 MiB v7x) --------
    try:
        vmem_cap = int(pltpu.get_tpu_info().vmem_capacity_bytes)
    except Exception:
        vmem_cap = 64 * 1024 * 1024       # conservative (v7x) fallback
    budget = int(vmem_cap * vmem_budget_frac)
    vmem_limit = int(vmem_cap * 0.75)     # well above scoped defaults

    img_rows = (H + 2) * W
    in_bytes = 2                          # padded image is stored in bf16
    out_bytes = x.dtype.itemsize
    weights_bytes = 2 * ((Cin + 1) * Hp * 2 + Hp * Cin * 2      # bf16, x2 buf
                         + (9 + 1) * Hp * 4 + Cin * 4)          # f32,  x2 buf

    def vmem_estimate(th):
        blk = th * W
        est = 2 * img_rows * (Cin + 1) * in_bytes   # resident image (x2 buf)
        est += weights_bytes + 2 * 2 * blk * 4      # weights + edge masks
        est += 2 * blk * Cin * out_bytes            # output (x2 buf)
        est += (th + 2) * W * Hp * 4                # h (fc1 output, f32)
        est += 3 * blk * Hp * 4                     # acc + column-group temps
        est += blk * Hp * 2 + blk * Cin * 4         # g (bf16) + y (f32)
        return est

    if row_tile is None:
        # Largest divisor of H whose live set fits the budget; keep TH*W a
        # multiple of 8 (sublane alignment) unless the whole image is taken.
        candidates = [t for t in range(1, H + 1)
                      if H % t == 0 and ((t * W) % 8 == 0 or t == H)]
        fitting = [t for t in candidates if vmem_estimate(t) <= budget]
        row_tile = max(fitting) if fitting else min(candidates)
        # NOTE: for very large H*W the per-batch resident image itself may
        # dominate; a carried-halo / per-row-block-x design would remove it
        # (at the cost of r becoming "arbitrary").
    TH = row_tile
    assert H % TH == 0
    nR = H // TH
    blk = TH * W

    # ---- parameters ---------------------------------------------------------
    def pad_cols(a, cols):
        return jnp.pad(a, ((0, 0), (0, cols - a.shape[1])))

    # fc1 weight with the bias folded in as an extra input row; bf16 for MXU.
    w1a = jnp.concatenate([params["w1"], params["b1"]], axis=0)     # (Cin+1,Hid)
    w1a = pad_cols(w1a, Hp).astype(jnp.bfloat16)
    dw = pad_cols(params["dw"], Hp).astype(jnp.float32)
    bdw = pad_cols(params["bdw"], Hp).astype(jnp.float32)
    w2 = jnp.pad(params["w2"], ((0, Hp - Hid), (0, 0))).astype(jnp.bfloat16)
    b2 = params["b2"].astype(jnp.float32)                            # (1, Cin)

    # Precomputed column-edge masks (shared by every row block).
    col = jnp.arange(blk, dtype=jnp.int32) % W
    not_left = (col != 0).astype(jnp.float32).reshape(blk, 1)
    not_right = (col != W - 1).astype(jnp.float32).reshape(blk, 1)

    # ---- input: native Cin + flag channel, 1-row halo pad, bf16 -------------
    # (No Cp channel padding and no output slice: both HBM passes removed.)
    x_img = x.reshape(B, H, W, Cin)
    flag = jnp.ones((B, H, W, 1), x.dtype)
    x_aug = jnp.concatenate([x_img, flag], axis=-1)                  # (B,H,W,Cin+1)
    x_aug = jnp.pad(x_aug, ((0, 0), (1, 1), (0, 0), (0, 0)))         # row halo
    x_aug = x_aug.reshape(B, (H + 2) * W, Cin + 1).astype(jnp.bfloat16)

    kernel = functools.partial(mixffn_kernel, th=TH, w=W)

    # Single-buffer the constant-index-map weight blocks only when they are
    # big enough for the reclaimed VMEM to matter (tiny demo weights keep the
    # default pipelining path).
    big_const = (w1a.size * 2 + w2.size * 2) >= (1 << 20)

    def const_spec(shape):
        if big_const:
            return pl.BlockSpec(shape, lambda b, r: (0, 0),
                                pipeline_mode=pl.Buffered(1))
        return pl.BlockSpec(shape, lambda b, r: (0, 0))

    flops = (2 * B * nR * (TH + 2) * W * (Cin + 1) * Hp    # fc1 (incl. halo)
             + 2 * B * H * W * Hp * Cin                    # fc2
             + 22 * B * H * W * Hp)                        # depthwise + misc
    bytes_accessed = (x_aug.size * 2
                      + w1a.size * 2 + w2.size * 2
                      + (dw.size + bdw.size + b2.size) * 4
                      + B * H * W * Cin * out_bytes)
    cost = pl.CostEstimate(flops=int(flops),
                           transcendentals=int(B * H * W * Hp),
                           bytes_accessed=int(bytes_accessed))

    out = pl.pallas_call(
        kernel,
        out_shape=jax.ShapeDtypeStruct((B, H * W, Cin), x.dtype),
        grid=(B, nR),
        in_specs=[
            # Whole (row-padded) image of the current batch element at native
            # Cin(+1); re-DMA'd only when b changes.
            pl.BlockSpec((None, (H + 2) * W, Cin + 1), lambda b, r: (b, 0, 0)),
            const_spec((Cin + 1, Hp)),
            const_spec((9, Hp)),
            const_spec((1, Hp)),
            const_spec((Hp, Cin)),
            const_spec((1, Cin)),
            pl.BlockSpec((blk, 1), lambda b, r: (0, 0)),
            pl.BlockSpec((blk, 1), lambda b, r: (0, 0)),
        ],
        out_specs=pl.BlockSpec((None, blk, Cin), lambda b, r: (b, r, 0)),
        compiler_params=pltpu.CompilerParams(
            dimension_semantics=("parallel", "parallel"),
            vmem_limit_bytes=vmem_limit),
        cost_estimate=cost,
    )(x_aug, w1a, dw, bdw, w2, b2, not_left, not_right)

    return out


def mixffn_reference(x, x_shape, params):
    """Pure-JAX f32 reference (mirrors the PyTorch forward)."""
    B, N, Cin = x.shape
    H, W = x_shape
    Hid = params["w1"].shape[1]
    xi = x.reshape(B, H, W, Cin).astype(jnp.float32)

    h = jnp.einsum("bhwc,cd->bhwd", xi, params["w1"]) \
        + params["b1"].reshape(1, 1, 1, Hid)

    dw_hwio = params["dw"].reshape(3, 3, 1, Hid)   # HWIO, depthwise
    h = lax.conv_general_dilated(
        h, dw_hwio, window_strides=(1, 1), padding=((1, 1), (1, 1)),
        dimension_numbers=("NHWC", "HWIO", "NHWC"),
        feature_group_count=Hid) + params["bdw"].reshape(1, 1, 1, Hid)

    g = _gelu_exact(h)
    y = jnp.einsum("bhwd,dc->bhwc", g, params["w2"]) \
        + params["b2"].reshape(1, 1, 1, Cin)
    return y.reshape(B, N, Cin)


def init_params(key, in_channels, hidden_size):
    ks = jax.random.split(key, 6)
    scale1 = 1.0 / math.sqrt(in_channels)
    scale_dw = 1.0 / math.sqrt(9.0)
    scale2 = 1.0 / math.sqrt(hidden_size)
    return {
        # fc1: PyTorch weight (Hid, Cin, 1, 1) -> stored as (Cin, Hid)
        "w1": jax.random.normal(ks[0], (in_channels, hidden_size), jnp.float32) * scale1,
        "b1": jax.random.normal(ks[1], (1, hidden_size), jnp.float32) * scale1,
        # pe_conv: PyTorch weight (Hid, 1, 3, 3) -> stored as (9, Hid), row = ki*3+kj
        "dw": jax.random.normal(ks[2], (9, hidden_size), jnp.float32) * scale_dw,
        "bdw": jax.random.normal(ks[3], (1, hidden_size), jnp.float32) * scale_dw,
        # fc2: PyTorch weight (Cin, Hid, 1, 1) -> stored as (Hid, Cin)
        "w2": jax.random.normal(ks[4], (hidden_size, in_channels), jnp.float32) * scale2,
        "b2": jax.random.normal(ks[5], (1, in_channels), jnp.float32) * scale2,
    }


if __name__ == "__main__":
    B, Cin, Hid = 2, 4, 32
    H = W = 16
    N = H * W

    key = jax.random.PRNGKey(0)
    kx, kp = jax.random.split(key)
    x = jax.random.normal(kx, (B, N, Cin), jnp.float32)   # module input (B, N, C)
    params = init_params(kp, Cin, Hid)

    ref = mixffn_reference(x, (H, W), params)

    # row_tile=4 -> grid=(B, 4): exercises first / interior / last row blocks.
    out = jax.block_until_ready(mixffn_pallas(x, (H, W), params, row_tile=4))
    assert out.shape == (B, N, Cin)
    max_err = float(jnp.max(jnp.abs(out - ref)))
    # bf16 MXU operands (f32 accumulate) -> tolerance loosened vs pure f32.
    assert jnp.allclose(out, ref, atol=5e-2, rtol=5e-2), max_err

    # VMEM-budgeted automatic row_tile (whole image per step at this size).
    out2 = jax.block_until_ready(mixffn_pallas(x, (H, W), params))
    max_err2 = float(jnp.max(jnp.abs(out2 - ref)))
    assert jnp.allclose(out2, ref, atol=5e-2, rtol=5e-2), max_err2

    print("KERNEL_OK")
</pallas_src>

<mosaic_0001>
module attributes {stable_mosaic.version = 11 : i64} {
  func.func @mixffn_kernel(%arg0: i32, %arg1: i32, %arg2: memref<1x288x5xbf16, #tpu.memory_space<vmem>>, %arg3: memref<5x128xbf16, #tpu.memory_space<vmem>>, %arg4: memref<9x128xf32, #tpu.memory_space<vmem>>, %arg5: memref<1x128xf32, #tpu.memory_space<vmem>>, %arg6: memref<128x4xbf16, #tpu.memory_space<vmem>>, %arg7: memref<1x4xf32, #tpu.memory_space<vmem>>, %arg8: memref<64x1xf32, #tpu.memory_space<vmem>>, %arg9: memref<64x1xf32, #tpu.memory_space<vmem>>, %arg10: memref<1x64x4xf32, #tpu.memory_space<vmem>>) attributes {dimension_semantics = [#tpu.dimension_semantics<parallel>, #tpu.dimension_semantics<parallel>], iteration_bounds = array<i64: 2, 4>, scalar_prefetch = 0 : i64, scratch_operands = 0 : i64, tpu.core_type = #tpu.core_type<tc>, window_params = [{transform_indices = @transform_0, window_bounds = array<i64: 1, 288, 5>}, {pipeline_mode = #tpu.pipeline_mode<synchronous>, transform_indices = @transform_1, window_bounds = array<i64: 5, 128>}, {pipeline_mode = #tpu.pipeline_mode<synchronous>, transform_indices = @transform_2, window_bounds = array<i64: 9, 128>}, {pipeline_mode = #tpu.pipeline_mode<synchronous>, transform_indices = @transform_3, window_bounds = array<i64: 1, 128>}, {pipeline_mode = #tpu.pipeline_mode<synchronous>, transform_indices = @transform_4, window_bounds = array<i64: 128, 4>}, {pipeline_mode = #tpu.pipeline_mode<synchronous>, transform_indices = @transform_5, window_bounds = array<i64: 1, 4>}, {pipeline_mode = #tpu.pipeline_mode<synchronous>, transform_indices = @transform_6, window_bounds = array<i64: 64, 1>}, {pipeline_mode = #tpu.pipeline_mode<synchronous>, transform_indices = @transform_7, window_bounds = array<i64: 64, 1>}, {transform_indices = @transform_8, window_bounds = array<i64: 1, 64, 4>}]} {
    %c64_i32 = arith.constant 64 : i32
    %0 = arith.muli %arg1, %c64_i32 : i32
    %1 = tpu.assume_multiple %0, 8 : i32
    %c0 = arith.constant 0 : index
    %2 = arith.index_cast %1 : i32 to index
    %c0_0 = arith.constant 0 : index
    %3 = vector.load %arg2[%c0, %2, %c0_0] : memref<1x288x5xbf16, #tpu.memory_space<vmem>>, vector<1x96x5xbf16>
    %4 = vector.shape_cast %3 : vector<1x96x5xbf16> to vector<96x5xbf16>
    %c0_1 = arith.constant 0 : index
    %c0_2 = arith.constant 0 : index
    %5 = vector.load %arg3[%c0_1, %c0_2] : memref<5x128xbf16, #tpu.memory_space<vmem>>, vector<5x128xbf16>
    %cst = arith.constant dense<0.000000e+00> : vector<96x128xf32>
    %6 = tpu.matmul %4, %5, %cst {dimension_numbers = #tpu.dot_dimension_numbers<[1], [0], [0], [1], [0, 0, 1, 1], [], []>} : vector<96x5xbf16>, vector<5x128xbf16>, vector<96x128xf32> -> vector<96x128xf32>
    %c0_3 = arith.constant 0 : index
    %c0_4 = arith.constant 0 : index
    %7 = vector.load %arg4[%c0_3, %c0_4] : memref<9x128xf32, #tpu.memory_space<vmem>>, vector<9x128xf32>
    %8 = vector.extract_strided_slice %6 {offsets = [0, 0], sizes = [64, 128], strides = [1, 1]} : vector<96x128xf32> to vector<64x128xf32>
    %9 = vector.extract_strided_slice %6 {offsets = [16, 0], sizes = [64, 128], strides = [1, 1]} : vector<96x128xf32> to vector<64x128xf32>
    %10 = vector.extract_strided_slice %6 {offsets = [32, 0], sizes = [64, 128], strides = [1, 1]} : vector<96x128xf32> to vector<64x128xf32>
    %11 = vector.extract_strided_slice %7 {offsets = [1, 0], sizes = [1, 128], strides = [1, 1]} : vector<9x128xf32> to vector<1x128xf32>
    %12 = vector.broadcast %11 : vector<1x128xf32> to vector<64x128xf32>
    %13 = arith.mulf %8, %12 : vector<64x128xf32>
    %14 = vector.extract_strided_slice %7 {offsets = [4, 0], sizes = [1, 128], strides = [1, 1]} : vector<9x128xf32> to vector<1x128xf32>
    %15 = vector.broadcast %14 : vector<1x128xf32> to vector<64x128xf32>
    %16 = arith.mulf %9, %15 : vector<64x128xf32>
    %17 = arith.addf %13, %16 : vector<64x128xf32>
    %18 = vector.extract_strided_slice %7 {offsets = [7, 0], sizes = [1, 128], strides = [1, 1]} : vector<9x128xf32> to vector<1x128xf32>
    %19 = vector.broadcast %18 : vector<1x128xf32> to vector<64x128xf32>
    %20 = arith.mulf %10, %19 : vector<64x128xf32>
    %21 = arith.addf %17, %20 : vector<64x128xf32>
    %c0_5 = arith.constant 0 : index
    %c0_6 = arith.constant 0 : index
    %22 = vector.load %arg5[%c0_5, %c0_6] : memref<1x128xf32, #tpu.memory_space<vmem>>, vector<1x128xf32>
    %23 = vector.broadcast %22 : vector<1x128xf32> to vector<64x128xf32>
    %24 = arith.addf %21, %23 : vector<64x128xf32>
    %25 = vector.extract_strided_slice %7 {offsets = [0, 0], sizes = [1, 128], strides = [1, 1]} : vector<9x128xf32> to vector<1x128xf32>
    %26 = vector.broadcast %25 : vector<1x128xf32> to vector<64x128xf32>
    %27 = arith.mulf %8, %26 : vector<64x128xf32>
    %28 = vector.extract_strided_slice %7 {offsets = [3, 0], sizes = [1, 128], strides = [1, 1]} : vector<9x128xf32> to vector<1x128xf32>
    %29 = vector.broadcast %28 : vector<1x128xf32> to vector<64x128xf32>
    %30 = arith.mulf %9, %29 : vector<64x128xf32>
    %31 = arith.addf %27, %30 : vector<64x128xf32>
    %32 = vector.extract_strided_slice %7 {offsets = [6, 0], sizes = [1, 128], strides = [1, 1]} : vector<9x128xf32> to vector<1x128xf32>
    %33 = vector.broadcast %32 : vector<1x128xf32> to vector<64x128xf32>
    %34 = arith.mulf %10, %33 : vector<64x128xf32>
    %35 = arith.addf %31, %34 : vector<64x128xf32>
    %c1_i32 = arith.constant 1 : i32
    %36 = tpu.dynamic_rotate %35 by %c1_i32 dim 0 : vector<64x128xf32>, i32 -> vector<64x128xf32>
    %c0_7 = arith.constant 0 : index
    %c0_8 = arith.constant 0 : index
    %37 = vector.load %arg8[%c0_7, %c0_8] : memref<64x1xf32, #tpu.memory_space<vmem>>, vector<64x1xf32>
    %38 = vector.broadcast %37 : vector<64x1xf32> to vector<64x128xf32>
    %39 = arith.mulf %36, %38 : vector<64x128xf32>
    %40 = arith.addf %24, %39 : vector<64x128xf32>
    %41 = vector.extract_strided_slice %7 {offsets = [2, 0], sizes = [1, 128], strides = [1, 1]} : vector<9x128xf32> to vector<1x128xf32>
    %42 = vector.broadcast %41 : vector<1x128xf32> to vector<64x128xf32>
    %43 = arith.mulf %8, %42 : vector<64x128xf32>
    %44 = vector.extract_strided_slice %7 {offsets = [5, 0], sizes = [1, 128], strides = [1, 1]} : vector<9x128xf32> to vector<1x128xf32>
    %45 = vector.broadcast %44 : vector<1x128xf32> to vector<64x128xf32>
    %46 = arith.mulf %9, %45 : vector<64x128xf32>
    %47 = arith.addf %43, %46 : vector<64x128xf32>
    %48 = vector.extract_strided_slice %7 {offsets = [8, 0], sizes = [1, 128], strides = [1, 1]} : vector<9x128xf32> to vector<1x128xf32>
    %49 = vector.broadcast %48 : vector<1x128xf32> to vector<64x128xf32>
    %50 = arith.mulf %10, %49 : vector<64x128xf32>
    %51 = arith.addf %47, %50 : vector<64x128xf32>
    %c63_i32 = arith.constant 63 : i32
    %52 = tpu.dynamic_rotate %51 by %c63_i32 dim 0 : vector<64x128xf32>, i32 -> vector<64x128xf32>
    %c0_9 = arith.constant 0 : index
    %c0_10 = arith.constant 0 : index
    %53 = vector.load %arg9[%c0_9, %c0_10] : memref<64x1xf32, #tpu.memory_space<vmem>>, vector<64x1xf32>
    %54 = vector.broadcast %53 : vector<64x1xf32> to vector<64x128xf32>
    %55 = arith.mulf %52, %54 : vector<64x128xf32>
    %56 = arith.addf %40, %55 : vector<64x128xf32>
    %cst_11 = arith.constant 5.000000e-01 : f32
    %57 = vector.broadcast %cst_11 : f32 to vector<64x128xf32>
    %58 = arith.mulf %57, %56 : vector<64x128xf32>
    %cst_12 = arith.constant 0.707106769 : f32
    %59 = vector.broadcast %cst_12 : f32 to vector<64x128xf32>
    %60 = arith.mulf %56, %59 : vector<64x128xf32>
    %61 = math.erf %60 : vector<64x128xf32>
    %cst_13 = arith.constant 1.000000e+00 : f32
    %62 = vector.broadcast %cst_13 : f32 to vector<64x128xf32>
    %63 = arith.addf %62, %61 : vector<64x128xf32>
    %64 = arith.mulf %58, %63 : vector<64x128xf32>
    %65 = arith.truncf %64 : vector<64x128xf32> to vector<64x128xbf16>
    %c0_14 = arith.constant 0 : index
    %c0_15 = arith.constant 0 : index
    %66 = vector.load %arg6[%c0_14, %c0_15] : memref<128x4xbf16, #tpu.memory_space<vmem>>, vector<128x4xbf16>
    %cst_16 = arith.constant dense<0.000000e+00> : vector<64x4xf32>
    %67 = tpu.matmul %65, %66, %cst_16 {dimension_numbers = #tpu.dot_dimension_numbers<[1], [0], [0], [1], [0, 0, 1, 1], [], []>} : vector<64x128xbf16>, vector<128x4xbf16>, vector<64x4xf32> -> vector<64x4xf32>
    %c0_17 = arith.constant 0 : index
    %c0_18 = arith.constant 0 : index
    %68 = vector.load %arg7[%c0_17, %c0_18] : memref<1x4xf32, #tpu.memory_space<vmem>>, vector<1x4xf32>
    %69 = vector.broadcast %68 : vector<1x4xf32> to vector<64x4xf32>
    %70 = arith.addf %67, %69 : vector<64x4xf32>
    %c0_19 = arith.constant 0 : index
    %c0_20 = arith.constant 0 : index
    %c0_21 = arith.constant 0 : index
    %71 = vector.load %arg10[%c0_19, %c0_20, %c0_21] : memref<1x64x4xf32, #tpu.memory_space<vmem>>, vector<1x64x4xf32>
    %72 = vector.shape_cast %71 : vector<1x64x4xf32> to vector<64x4xf32>
    %73 = vector.shape_cast %70 : vector<64x4xf32> to vector<1x64x4xf32>
    tpu.vector_store %arg10[%c0_19, %c0_20, %c0_21], %73 {strides = array<i32>} : memref<1x64x4xf32, #tpu.memory_space<vmem>>, vector<1x64x4xf32>,
    return
  }
  func.func @transform_0(%arg0: i32, %arg1: i32) -> (i32, i32, i32) {
    %c0_i32 = arith.constant 0 : i32
    %c0_i32_0 = arith.constant 0 : i32
    %c0_i32_1 = arith.constant 0 : i32
    return %arg0, %c0_i32, %c0_i32_0 : i32, i32, i32
  }
  func.func @transform_1(%arg0: i32, %arg1: i32) -> (i32, i32) {
    %c0_i32 = arith.constant 0 : i32
    %c0_i32_0 = arith.constant 0 : i32
    %c0_i32_1 = arith.constant 0 : i32
    return %c0_i32, %c0_i32_0 : i32, i32
  }
  func.func @transform_2(%arg0: i32, %arg1: i32) -> (i32, i32) {
    %c0_i32 = arith.constant 0 : i32
    %c0_i32_0 = arith.constant 0 : i32
    %c0_i32_1 = arith.constant 0 : i32
    return %c0_i32, %c0_i32_0 : i32, i32
  }
  func.func @transform_3(%arg0: i32, %arg1: i32) -> (i32, i32) {
    %c0_i32 = arith.constant 0 : i32
    %c0_i32_0 = arith.constant 0 : i32
    %c0_i32_1 = arith.constant 0 : i32
    return %c0_i32, %c0_i32_0 : i32, i32
  }
  func.func @transform_4(%arg0: i32, %arg1: i32) -> (i32, i32) {
    %c0_i32 = arith.constant 0 : i32
    %c0_i32_0 = arith.constant 0 : i32
    %c0_i32_1 = arith.constant 0 : i32
    return %c0_i32, %c0_i32_0 : i32, i32
  }
  func.func @transform_5(%arg0: i32, %arg1: i32) -> (i32, i32) {
    %c0_i32 = arith.constant 0 : i32
    %c0_i32_0 = arith.constant 0 : i32
    %c0_i32_1 = arith.constant 0 : i32
    return %c0_i32, %c0_i32_0 : i32, i32
  }
  func.func @transform_6(%arg0: i32, %arg1: i32) -> (i32, i32) {
    %c0_i32 = arith.constant 0 : i32
    %c0_i32_0 = arith.constant 0 : i32
    %c0_i32_1 = arith.constant 0 : i32
    return %c0_i32, %c0_i32_0 : i32, i32
  }
  func.func @transform_7(%arg0: i32, %arg1: i32) -> (i32, i32) {
    %c0_i32 = arith.constant 0 : i32
    %c0_i32_0 = arith.constant 0 : i32
    %c0_i32_1 = arith.constant 0 : i32
    return %c0_i32, %c0_i32_0 : i32, i32
  }
  func.func @transform_8(%arg0: i32, %arg1: i32) -> (i32, i32, i32) {
    %c0_i32 = arith.constant 0 : i32
    %c0_i32_0 = arith.constant 0 : i32
    return %arg0, %arg1, %c0_i32 : i32, i32, i32
  }
}

</mosaic_0001>

<llo_original>
// kernel: tpu_custom_call.1
$region0: #{tpu_custom_call.1}
  #allocation0 [shape = 'u32[]', space=smem, size = 0x4, offset = 0x4, fixed_abs, tag = 'smem constant byte address 0x4 - core index']
  #allocation1 [shape = 'u32[144,128]{1,0:T(1,128)}', space=vmem, size = 0x12000, scoped, tag = 'internal scratch']
  %s0 = inlined_call_operand.vmem [shape: bf16[2,288,5], index: 0, kind: input, shape index: {}]
  %s1 = inlined_call_operand.vmem [shape: bf16[5,128], index: 1, kind: input, shape index: {}]
  %s2 = inlined_call_operand.vmem [shape: f32[9,128], index: 2, kind: input, shape index: {}]
  %s3 = inlined_call_operand.vmem [shape: f32[1,128], index: 3, kind: input, shape index: {}]
  %s4 = inlined_call_operand.vmem [shape: bf16[128,4], index: 4, kind: input, shape index: {}]
  %s5 = inlined_call_operand.vmem [shape: f32[1,4], index: 5, kind: input, shape index: {}]
  %s6 = inlined_call_operand.vmem [shape: f32[64,1], index: 6, kind: input, shape index: {}]
  %s7 = inlined_call_operand.vmem [shape: f32[64,1], index: 7, kind: input, shape index: {}]
  %s8 = inlined_call_operand.vmem [shape: f32[2,256,4], index: 8, kind: output, shape index: {}]
  %s9 = sld [smem:[#allocation0]]
  $region65: #{tpu_custom_call.1} parent=0
    _
  %s11 = ssub.s32 1, %s9
  %s12 = scalar_select 0, %s11, %s9
  loop: start=0, step=1, limit=10
  $region2: #{tpu_custom_call.1} parent=0 // loop_pre_header
    _
  $region3: #{tpu_custom_call.1} parent=0 // loop_header
    %s14 = sphi 0, %s18
    %p15 = scmp.ge.s32.totalorder %s14, 10
    %s21 = sphi 0, %s33
    %s22 = sphi 0, %s29
    %s23 = sphi 0, %s21
    %s24 = sphi 0, %s22
    %s25 = sphi 0, %s23
    %s26 = sphi 0, %s24
    %s36 = sphi 0, %s38
    %s39 = sphi 0, %s36
    %s40 = sphi 0, %s39
    %s56 = sphi 0, %s40
    %s60 = sphi 0, %s60
    %s62 = sphi 0, %s60
    %s63 = sphi 0, %s62
    %s77 = sphi 0, %s63
    %s81 = sphi 0, %s81
    %s83 = sphi 0, %s81
    %s84 = sphi 0, %s83
    %s98 = sphi 0, %s84
    %s102 = sphi 0, %s102
    %s104 = sphi 0, %s102
    %s105 = sphi 0, %s104
    %s119 = sphi 0, %s105
    %s123 = sphi 0, %s123
    %s125 = sphi 0, %s123
    %s126 = sphi 0, %s125
    %s140 = sphi 0, %s126
    %s144 = sphi 0, %s144
    %s146 = sphi 0, %s144
    %s147 = sphi 0, %s146
    %s161 = sphi 0, %s147
    %s165 = sphi 0, %s165
    %s167 = sphi 0, %s165
    %s168 = sphi 0, %s167
    %s182 = sphi 0, %s168
    %s186 = sphi 0, %s186
    %s188 = sphi 0, %s186
    %s189 = sphi 0, %s188
    %s203 = sphi 0, %s189
    %s211 = sphi 0, %s213
    %s214 = sphi 0, %s211
    %s215 = sphi 0, %s214
    %s231 = sphi 0, %s215
  $region4: #{tpu_custom_call.1} parent=0 // loop_header_branch
    %17 = sbr.rel (%p15) target = $region8
  $region5: #{tpu_custom_call.1} parent=0 // loop_body
    %s19 = ssub.s32 %s14, 1
    %s20 = ssub.s32 %s14, 2
    %s27 = sadd.s32 1, %s22
    %p28 = scmp.ge.s32.totalorder %s27, 4
    %s29 = scalar_select %p28, 0, %s27
    %s30 = sadd.s32 1, %s21
    %s31 = scalar_select %p28, %s30, %s21
    %p32 = scmp.ge.s32.totalorder %s31, 2
    %s33 = scalar_select %p32, 0, %s31
    %s34 = ssub.s32 %s21, %s33
    %p35 = scmp.eq.s32.totalorder %s34, 0
    %s37 = sadd.s32 %s36, 1
    %s38 = scalar_select %p35, %s36, %s37
    %p41 = pneg %p35
    %p42 = scmp.eq.s32.totalorder %s14, 7
    %p43 = por %p41, %p42
    %p44 = scmp.ne.s32.totalorder %s36, %s39
    %p45 = scmp.eq.s32.totalorder %s14, 0
    %p46 = por %p44, %p45
    %p47 = scmp.ne.s32.totalorder %s36, %s39
    %p48 = scmp.eq.s32.totalorder %s19, 7
    %p49 = por %p47, %p48
    %p50 = scmp.ne.s32.totalorder %s39, %s40
    %p51 = scmp.eq.s32.totalorder %s19, 0
    %p52 = por %p50, %p51
    %p53 = scmp.ne.s32.totalorder %s39, %s40
    %p54 = scmp.eq.s32.totalorder %s20, 7
    %p55 = por %p53, %p54
    %p57 = scmp.ne.s32.totalorder %s40, %s56
    %p58 = scmp.eq.s32.totalorder %s20, 0
    %p59 = por %p57, %p58
    %s61 = sadd.s32 %s60, 1
    %p64 = scmp.eq.s32.totalorder %s14, 7
    %p65 = scmp.ne.s32.totalorder %s60, %s62
    %p66 = scmp.eq.s32.totalorder %s14, 0
    %p67 = por %p65, %p66
    %p68 = scmp.ne.s32.totalorder %s60, %s62
    %p69 = scmp.eq.s32.totalorder %s19, 7
    %p70 = por %p68, %p69
    %p71 = scmp.ne.s32.totalorder %s62, %s63
    %p72 = scmp.eq.s32.totalorder %s19, 0
    %p73 = por %p71, %p72
    %p74 = scmp.ne.s32.totalorder %s62, %s63
    %p75 = scmp.eq.s32.totalorder %s20, 7
    %p76 = por %p74, %p75
    %p78 = scmp.ne.s32.totalorder %s63, %s77
    %p79 = scmp.eq.s32.totalorder %s20, 0
    %p80 = por %p78, %p79
    %s82 = sadd.s32 %s81, 1
    %p85 = scmp.eq.s32.totalorder %s14, 7
    %p86 = scmp.ne.s32.totalorder %s81, %s83
    %p87 = scmp.eq.s32.totalorder %s14, 0
    %p88 = por %p86, %p87
    %p89 = scmp.ne.s32.totalorder %s81, %s83
    %p90 = scmp.eq.s32.totalorder %s19, 7
    %p91 = por %p89, %p90
    %p92 = scmp.ne.s32.totalorder %s83, %s84
    %p93 = scmp.eq.s32.totalorder %s19, 0
    %p94 = por %p92, %p93
    %p95 = scmp.ne.s32.totalorder %s83, %s84
    %p96 = scmp.eq.s32.totalorder %s20, 7
    %p97 = por %p95, %p96
    %p99 = scmp.ne.s32.totalorder %s84, %s98
    %p100 = scmp.eq.s32.totalorder %s20, 0
    %p101 = por %p99, %p100
    %s103 = sadd.s32 %s102, 1
    %p106 = scmp.eq.s32.totalorder %s14, 7
    %p107 = scmp.ne.s32.totalorder %s102, %s104
    %p108 = scmp.eq.s32.totalorder %s14, 0
    %p109 = por %p107, %p108
    %p110 = scmp.ne.s32.totalorder %s102, %s104
    %p111 = scmp.eq.s32.totalorder %s19, 7
    %p112 = por %p110, %p111
    %p113 = scmp.ne.s32.totalorder %s104, %s105
    %p114 = scmp.eq.s32.totalorder %s19, 0
    %p115 = por %p113, %p114
    %p116 = scmp.ne.s32.totalorder %s104, %s105
    %p117 = scmp.eq.s32.totalorder %s20, 7
    %p118 = por %p116, %p117
    %p120 = scmp.ne.s32.totalorder %s105, %s119
    %p121 = scmp.eq.s32.totalorder %s20, 0
    %p122 = por %p120, %p121
    %s124 = sadd.s32 %s123, 1
    %p127 = scmp.eq.s32.totalorder %s14, 7
    %p128 = scmp.ne.s32.totalorder %s123, %s125
    %p129 = scmp.eq.s32.totalorder %s14, 0
    %p130 = por %p128, %p129
    %p131 = scmp.ne.s32.totalorder %s123, %s125
    %p132 = scmp.eq.s32.totalorder %s19, 7
    %p133 = por %p131, %p132
    %p134 = scmp.ne.s32.totalorder %s125, %s126
    %p135 = scmp.eq.s32.totalorder %s19, 0
    %p136 = por %p134, %p135
    %p137 = scmp.ne.s32.totalorder %s125, %s126
    %p138 = scmp.eq.s32.totalorder %s20, 7
    %p139 = por %p137, %p138
    %p141 = scmp.ne.s32.totalorder %s126, %s140
    %p142 = scmp.eq.s32.totalorder %s20, 0
    %p143 = por %p141, %p142
    %s145 = sadd.s32 %s144, 1
    %p148 = scmp.eq.s32.totalorder %s14, 7
    %p149 = scmp.ne.s32.totalorder %s144, %s146
    %p150 = scmp.eq.s32.totalorder %s14, 0
    %p151 = por %p149, %p150
    %p152 = scmp.ne.s32.totalorder %s144, %s146
    %p153 = scmp.eq.s32.totalorder %s19, 7
    %p154 = por %p152, %p153
    %p155 = scmp.ne.s32.totalorder %s146, %s147
    %p156 = scmp.eq.s32.totalorder %s19, 0
    %p157 = por %p155, %p156
    %p158 = scmp.ne.s32.totalorder %s146, %s147
    %p159 = scmp.eq.s32.totalorder %s20, 7
    %p160 = por %p158, %p159
    %p162 = scmp.ne.s32.totalorder %s147, %s161
    %p163 = scmp.eq.s32.totalorder %s20, 0
    %p164 = por %p162, %p163
    %s166 = sadd.s32 %s165, 1
    %p169 = scmp.eq.s32.totalorder %s14, 7
    %p170 = scmp.ne.s32.totalorder %s165, %s167
    %p171 = scmp.eq.s32.totalorder %s14, 0
    %p172 = por %p170, %p171
    %p173 = scmp.ne.s32.totalorder %s165, %s167
    %p174 = scmp.eq.s32.totalorder %s19, 7
    %p175 = por %p173, %p174
    %p176 = scmp.ne.s32.totalorder %s167, %s168
    %p177 = scmp.eq.s32.totalorder %s19, 0
    %p178 = por %p176, %p177
    %p179 = scmp.ne.s32.totalorder %s167, %s168
    %p180 = scmp.eq.s32.totalorder %s20, 7
    %p181 = por %p179, %p180
    %p183 = scmp.ne.s32.totalorder %s168, %s182
    %p184 = scmp.eq.s32.totalorder %s20, 0
    %p185 = por %p183, %p184
    %s187 = sadd.s32 %s186, 1
    %p190 = scmp.eq.s32.totalorder %s14, 7
    %p191 = scmp.ne.s32.totalorder %s186, %s188
    %p192 = scmp.eq.s32.totalorder %s14, 0
    %p193 = por %p191, %p192
    %p194 = scmp.ne.s32.totalorder %s186, %s188
    %p195 = scmp.eq.s32.totalorder %s19, 7
    %p196 = por %p194, %p195
    %p197 = scmp.ne.s32.totalorder %s188, %s189
    %p198 = scmp.eq.s32.totalorder %s19, 0
    %p199 = por %p197, %p198
    %p200 = scmp.ne.s32.totalorder %s188, %s189
    %p201 = scmp.eq.s32.totalorder %s20, 7
    %p202 = por %p200, %p201
    %p204 = scmp.ne.s32.totalorder %s189, %s203
    %p205 = scmp.eq.s32.totalorder %s20, 0
    %p206 = por %p204, %p205
    %s207 = ssub.s32 %s21, %s33
    %s208 = ssub.s32 %s22, %s29
    %s209 = sor.u32 %s207, %s208
    %p210 = scmp.eq.s32.totalorder %s209, 0
    %s212 = sadd.s32 %s211, 1
    %s213 = scalar_select %p210, %s211, %s212
    %p216 = pneg %p210
    %p217 = scmp.eq.s32.totalorder %s14, 7
    %p218 = por %p216, %p217
    %p219 = scmp.ne.s32.totalorder %s211, %s214
    %p220 = scmp.eq.s32.totalorder %s14, 0
    %p221 = por %p219, %p220
    %p222 = scmp.ne.s32.totalorder %s211, %s214
    %p223 = scmp.eq.s32.totalorder %s19, 7
    %p224 = por %p222, %p223
    %p225 = scmp.ne.s32.totalorder %s214, %s215
    %p226 = scmp.eq.s32.totalorder %s19, 0
    %p227 = por %p225, %p226
    %p228 = scmp.ne.s32.totalorder %s214, %s215
    %p229 = scmp.eq.s32.totalorder %s20, 7
    %p230 = por %p228, %p229
    %p232 = scmp.ne.s32.totalorder %s215, %s231
    %p233 = scmp.eq.s32.totalorder %s20, 0
    %p234 = por %p232, %p233
    %p235 = scmp.le.s32.totalorder 1, %s14
    %p236 = scmp.lt.s32.totalorder %s14, 9
    %p237 = pnand %p235, %p236
    %p238 = pneg %p237
    // Predicated region
    $region9: #{tpu_custom_call.1} parent=5 // pred_check
      _
    $region10: #{tpu_custom_call.1} parent=5 // pred_check_branch
      %240 = sbr.rel (%p237) target = $region12
    $region11: #{tpu_custom_call.1} parent=5 // pred_region
      %s241 = ssub.s32 %s14, 1
      // Predicated region
      $region13: #{tpu_custom_call.1} parent=11 // pred_check
        %p242 = pneg %p73
      $region14: #{tpu_custom_call.1} parent=11 // pred_check_branch
        %244 = sbr.rel (%p242) target = $region16
      $region15: #{tpu_custom_call.1} parent=11 // pred_region
        _
      $region16: #{tpu_custom_call.1} parent=11 // pred_fallthru
        _
      // Predicated region
      $region17: #{tpu_custom_call.1} parent=11 // pred_check
        %p245 = pneg %p94
      $region18: #{tpu_custom_call.1} parent=11 // pred_check_branch
        %247 = sbr.rel (%p245) target = $region20
      $region19: #{tpu_custom_call.1} parent=11 // pred_region
        _
      $region20: #{tpu_custom_call.1} parent=11 // pred_fallthru
        _
      // Predicated region
      $region21: #{tpu_custom_call.1} parent=11 // pred_check
        %p248 = pneg %p115
      $region22: #{tpu_custom_call.1} parent=11 // pred_check_branch
        %250 = sbr.rel (%p248) target = $region24
      $region23: #{tpu_custom_call.1} parent=11 // pred_region
        _
      $region24: #{tpu_custom_call.1} parent=11 // pred_fallthru
        _
      // Predicated region
      $region25: #{tpu_custom_call.1} parent=11 // pred_check
        %p251 = pneg %p136
      $region26: #{tpu_custom_call.1} parent=11 // pred_check_branch
        %253 = sbr.rel (%p251) target = $region28
      $region27: #{tpu_custom_call.1} parent=11 // pred_region
        _
      $region28: #{tpu_custom_call.1} parent=11 // pred_fallthru
        _
      // Predicated region
      $region29: #{tpu_custom_call.1} parent=11 // pred_check
        %p254 = pneg %p157
      $region30: #{tpu_custom_call.1} parent=11 // pred_check_branch
        %256 = sbr.rel (%p254) target = $region32
      $region31: #{tpu_custom_call.1} parent=11 // pred_region
        _
      $region32: #{tpu_custom_call.1} parent=11 // pred_fallthru
        _
      // Predicated region
      $region33: #{tpu_custom_call.1} parent=11 // pred_check
        %p257 = pneg %p178
      $region34: #{tpu_custom_call.1} parent=11 // pred_check_branch
        %259 = sbr.rel (%p257) target = $region36
      $region35: #{tpu_custom_call.1} parent=11 // pred_region
        _
      $region36: #{tpu_custom_call.1} parent=11 // pred_fallthru
        _
      // Predicated region
      $region37: #{tpu_custom_call.1} parent=11 // pred_check
        %p260 = pneg %p199
      $region38: #{tpu_custom_call.1} parent=11 // pred_check_branch
        %262 = sbr.rel (%p260) target = $region40
      $region39: #{tpu_custom_call.1} parent=11 // pred_region
        _
      $region40: #{tpu_custom_call.1} parent=11 // pred_fallthru
        _
    $region12: #{tpu_custom_call.1} parent=5 // pred_fallthru
      _
    %p263 = scmp.lt.s32.totalorder %s14, 8
    // Predicated region
    $region41: #{tpu_custom_call.1} parent=5 // pred_check
      %p264 = pneg %p263
    $region42: #{tpu_custom_call.1} parent=5 // pred_check_branch
      %266 = sbr.rel (%p264) target = $region44
    $region43: #{tpu_custom_call.1} parent=5 // pred_region
      // Predicated region
      $region45: #{tpu_custom_call.1} parent=43 // pred_check
        %p267 = pneg %p46
      $region46: #{tpu_custom_call.1} parent=43 // pred_check_branch
        %269 = sbr.rel (%p267) target = $region48
      $region47: #{tpu_custom_call.1} parent=43 // pred_region
        %p270 = scmp.lt.s32.totalorder %s21, 1
        %s271 = scalar_select %p270, %s21, 1
        %s272 = smul.addr %s271, 36
        %s273 = smul.addr %s272, 4
        %s274 = scalar_lea.vmem %s0, %s273
      $region48: #{tpu_custom_call.1} parent=43 // pred_fallthru
        _
    $region44: #{tpu_custom_call.1} parent=5 // pred_fallthru
      _
    %p275 = scmp.le.s32.totalorder 1, %s14
    %p276 = scmp.lt.s32.totalorder %s14, 9
    %p277 = pnand %p275, %p276
    %p278 = pneg %p277
    // Predicated region
    $region49: #{tpu_custom_call.1} parent=5 // pred_check
      _
    $region50: #{tpu_custom_call.1} parent=5 // pred_check_branch
      %280 = sbr.rel (%p277) target = $region52
    $region51: #{tpu_custom_call.1} parent=5 // pred_region
      %s281 = ssub.s32 %s14, 1
      %p282 = scmp.lt.s32.totalorder %s23, 1
      %s283 = scalar_select %p282, %s23, 1
      %s284 = smul.addr %s283, 36
      %s285 = smul.addr %s284, 4
      %s286 = scalar_lea.vmem %s0, %s285
      %p287 = pneg %p52
      %p288 = pneg %p49
      %p289 = pneg %p73
      %p290 = pneg %p70
      %p291 = pneg %p94
      %p292 = pneg %p91
      %p293 = pneg %p115
      %p294 = pneg %p112
      %p295 = pneg %p136
      %p296 = pneg %p133
      %p297 = pneg %p157
      %p298 = pneg %p154
      %p299 = pneg %p178
      %p300 = pneg %p175
      %p301 = pneg %p199
      %p302 = pneg %p196
      %p303 = pneg %p227
      %p304 = pneg %p224
      %s305 = smul.u32 8, %s24
      %p306 = scmp.lt.s32.totalorder %s23, 1
      %s307 = scalar_select %p306, %s23, 1
      %p308 = scmp.lt.s32.totalorder %s305, 31
      %s309 = scalar_select %p308, %s305, 31
      %s310 = smul.addr %s307, 32
      %s311 = sadd.s32 %s309, %s310
      %s312 = smul.addr %s311, 8
      %s313 = scalar_lea.vmem %s8, %s312
      %p314 = scmp.lt.s32.totalorder %s23, 1
      %s315 = scalar_select %p314, %s23, 1
      %s316 = smul.addr %s315, 36
      %s317 = smul.addr %s316, 4
      %s318 = scalar_lea.vmem %s0, %s317
      %s319 = smul.u32 8, %s24
      %p320 = scmp.lt.s32.totalorder %s23, 1
      %s321 = scalar_select %p320, %s23, 1
      %p322 = scmp.lt.s32.totalorder %s319, 31
      %s323 = scalar_select %p322, %s319, 31
      %s324 = smul.addr %s321, 32
      %s325 = sadd.s32 %s323, %s324
      %s326 = smul.addr %s325, 8
      %s327 = scalar_lea.vmem %s8, %s326
      %s328 = smul.u32 8, %s24
      %s330 = smul.u32 %s24, 64
      %s331 = sshra.s32 %s330, 3
      %s332 = sand.u32 %s330, 7
      %s333 = smul.addr %s331, 4
      %s334 = scalar_lea.vmem %s318, %s333
      %v335 = vld [vmem:[%s334] sm:$0xf]
      %v336 = vld [vmem:[%s334 + $0x4] sm:$0xf]
      %v337 = vld [vmem:[%s334 + $0x8] sm:$0xf]
      %v338 = vld [vmem:[%s334 + $0xc] sm:$0xf]
      %v339 = vld [vmem:[%s334 + $0x10] sm:$0xf]
      %v340 = vld [vmem:[%s334 + $0x14] sm:$0xf]
      %v341 = vld [vmem:[%s334 + $0x18] sm:$0xf]
      %v342 = vld [vmem:[%s334 + $0x1c] sm:$0xf]
      %v343 = vld [vmem:[%s334 + $0x20] sm:$0xf]
      %v344 = vld [vmem:[%s334 + $0x24] sm:$0xf]
      %v345 = vld [vmem:[%s334 + $0x28] sm:$0xf]
      %v346 = vld [vmem:[%s334 + $0x2c] sm:$0xf]
      %v347 = vld [vmem:[%s1] sm:$0x7]
      %v360 = vunpack.c.l.b16 %v335
      %v361 = vunpack.c.l.b16 %v336
      %v362 = vunpack.c.l.b16 %v337
      %v363 = vunpack.c.l.b16 %v338
      %v364 = vunpack.c.l.b16 %v339
      %v365 = vunpack.c.l.b16 %v340
      %v366 = vunpack.c.l.b16 %v341
      %v367 = vunpack.c.l.b16 %v342
      %v368 = vunpack.c.l.b16 %v343
      %v369 = vunpack.c.l.b16 %v344
      %v370 = vunpack.c.l.b16 %v345
      %v371 = vunpack.c.l.b16 %v346
      %v372 = vpack.c.b16 %v361, %v360
      %v373 = vpack.c.b16 %v363, %v362
      %v374 = vpack.c.b16 %v365, %v364
      %v375 = vpack.c.b16 %v367, %v366
      %v376 = vpack.c.b16 %v369, %v368
      %v377 = vpack.c.b16 %v371, %v370
      %vm378 = vcmask 39936
      %v380 = vsel %vm378, %v372, 0
      %v383 = vsel %vm378, %v373, 0
      %v386 = vsel %vm378, %v374, 0
      %v389 = vsel %vm378, %v375, 0
      %v392 = vsel %vm378, %v376, 0
      %v395 = vsel %vm378, %v377, 0
      %vm397 = vcmask 1041408
      %vm398 = vcmask 1042432
      %v399 = vsel %vm397, 4294967295, 65535
      %v400 = vsel %vm398, %v399, 0
      %v402 = vand.u32 %v347, %v400
      %404 = vmatprep.subr.bf16.mxu0 0
      %405 = vmatpush1.bf16.msra.mxu0 0
      %406 = vmatprep.subr.bf16.mxu0 0
      %407 = vmatpush1.bf16.msra.mxu0 0
      %408 = vmatprep.subr.bf16.mxu0 0
      %409 = vmatpush1.bf16.msra.mxu0 0
      %410 = vmatprep.subr.bf16.mxu0 0
      %411 = vmatpush1.bf16.msra.mxu0 0
      %412 = vmatprep.subr.bf16.mxu0 0
      %413 = vmatpush1.bf16.msra.mxu0 0
      %414 = vmatprep.subr.bf16.mxu0 0
      %415 = vmatpush1.bf16.msra.mxu0 0
      %416 = vmatprep.subr.bf16.mxu0 0
      %417 = vmatpush1.bf16.msra.mxu0 0
      %418 = vmatprep.subr.bf16.mxu0 0
      %419 = vmatpush1.bf16.msra.mxu0 %v402
      %420 = vmatprep.subr.bf16.mxu0 0
      %421 = vmatpush2.bf16.msra.mxu0 0
      %422 = vmatprep.subr.bf16.mxu0 0
      %423 = vmatpush2.bf16.msra.mxu0 0
      %424 = vmatprep.subr.bf16.mxu0 0
      %425 = vmatpush2.bf16.msra.mxu0 0
      %426 = vmatprep.subr.bf16.mxu0 0
      %427 = vmatpush2.bf16.msra.mxu0 0
      %428 = vmatprep.subr.bf16.mxu0 0
      %429 = vmatpush2.bf16.msra.mxu0 0
      %430 = vmatprep.subr.bf16.mxu0 0
      %431 = vmatpush2.bf16.msra.mxu0 0
      %432 = vmatprep.subr.bf16.mxu0 0
      %433 = vmatpush2.bf16.msra.mxu0 0
      %434 = vmatprep.subr.bf16.mxu0 0
      %435 = vmatpush2.bf16.msra.mxu0 0
      %436 = vmatprep.mubr.bf16.mxu0 0
      %437 = vmatmul.mubr.bf16.gmra.mxu0 %v380
      %v438 = vpop.f32.mrf.mxu0
      %v439 = vadd.f32 0.0, %v438
      %v440 = vpop.f32.mrf.mxu0
      %v441 = vpop.f32.mrf.mxu0
      %v442 = vadd.f32 0.0, %v441
      %v443 = vpop.f32.mrf.mxu0
      %444 = vmatprep.mubr.bf16.mxu0 0
      %445 = vmatmul.mubr.bf16.gmra.mxu0 %v383
      %v446 = vpop.f32.mrf.mxu0
      %v447 = vadd.f32 0.0, %v446
      %v448 = vpop.f32.mrf.mxu0
      %v449 = vpop.f32.mrf.mxu0
      %v450 = vadd.f32 0.0, %v449
      %v451 = vpop.f32.mrf.mxu0
      %452 = vmatprep.mubr.bf16.mxu0 0
      %453 = vmatmul.mubr.bf16.gmra.mxu0 %v386
      %v454 = vpop.f32.mrf.mxu0
      %v455 = vadd.f32 0.0, %v454
      %v456 = vpop.f32.mrf.mxu0
      %v457 = vpop.f32.mrf.mxu0
      %v458 = vadd.f32 0.0, %v457
      %v459 = vpop.f32.mrf.mxu0
      %460 = vmatprep.mubr.bf16.mxu0 0
      %461 = vmatmul.mubr.bf16.gmra.mxu0 %v389
      %v462 = vpop.f32.mrf.mxu0
      %v463 = vadd.f32 0.0, %v462
      %v464 = vpop.f32.mrf.mxu0
      %v465 = vpop.f32.mrf.mxu0
      %v466 = vadd.f32 0.0, %v465
      %v467 = vpop.f32.mrf.mxu0
      %468 = vmatprep.mubr.bf16.mxu0 0
      %469 = vmatmul.mubr.bf16.gmra.mxu0 %v392
      %v470 = vpop.f32.mrf.mxu0
      %v471 = vadd.f32 0.0, %v470
      %v472 = vpop.f32.mrf.mxu0
      %v473 = vpop.f32.mrf.mxu0
      %v474 = vadd.f32 0.0, %v473
      %v475 = vpop.f32.mrf.mxu0
      %476 = vmatprep.mubr.bf16.mxu0 0
      %477 = vmatmul.mubr.bf16.gmra.mxu0 %v395
      %v478 = vpop.f32.mrf.mxu0
      %v479 = vadd.f32 0.0, %v478
      %v480 = vpop.f32.mrf.mxu0
      %v481 = vpop.f32.mrf.mxu0
      %v482 = vadd.f32 0.0, %v481
      %v483 = vpop.f32.mrf.mxu0
      %484 = vdwg.mxu0
      %v485 = vld [vmem:[%s2] sm:$0xff]
      %v486 = vld [vmem:[%s2 + $0x8] sm:$0x1]
      %v487 = vlaneseq
      %v488 = vshrl.u32 %v487, 7
      %v489 = vsub.s32 1, %v488
      %v490 = vrot.slane %v485, %v489
      %v491 = vmul.f32 %v439, %v490
      %v492 = vmul.f32 %v442, %v490
      %v493 = vmul.f32 %v447, %v490
      %v494 = vmul.f32 %v450, %v490
      %v495 = vmul.f32 %v455, %v490
      %v496 = vmul.f32 %v458, %v490
      %v497 = vmul.f32 %v463, %v490
      %v498 = vmul.f32 %v466, %v490
      %v499 = vlaneseq
      %v500 = vshrl.u32 %v499, 7
      %v501 = vsub.s32 4, %v500
      %v502 = vrot.slane %v485, %v501
      %v503 = vmul.f32 %v447, %v502
      %v504 = vmul.f32 %v450, %v502
      %v505 = vmul.f32 %v455, %v502
      %v506 = vmul.f32 %v458, %v502
      %v507 = vmul.f32 %v463, %v502
      %v508 = vmul.f32 %v466, %v502
      %v509 = vmul.f32 %v471, %v502
      %v510 = vmul.f32 %v474, %v502
      %v511 = vadd.f32 %v491, %v503
      %v512 = vadd.f32 %v492, %v504
      %v513 = vadd.f32 %v493, %v505
      %v514 = vadd.f32 %v494, %v506
      %v515 = vadd.f32 %v495, %v507
      %v516 = vadd.f32 %v496, %v508
      %v517 = vadd.f32 %v497, %v509
      %v518 = vadd.f32 %v498, %v510
      %v519 = vlaneseq
      %v520 = vshrl.u32 %v519, 7
      %v521 = vsub.s32 7, %v520
      %v522 = vrot.slane %v485, %v521
      %v523 = vmul.f32 %v455, %v522
      %v524 = vmul.f32 %v458, %v522
      %v525 = vmul.f32 %v463, %v522
      %v526 = vmul.f32 %v466, %v522
      %v527 = vmul.f32 %v471, %v522
      %v528 = vmul.f32 %v474, %v522
      %v529 = vmul.f32 %v479, %v522
      %v530 = vmul.f32 %v482, %v522
      %v531 = vadd.f32 %v511, %v523
      %v532 = vadd.f32 %v512, %v524
      %v533 = vadd.f32 %v513, %v525
      %v534 = vadd.f32 %v514, %v526
      %v535 = vadd.f32 %v515, %v527
      %v536 = vadd.f32 %v516, %v528
      %v537 = vadd.f32 %v517, %v529
      %v538 = vadd.f32 %v518, %v530
      %v539 = vld [vmem:[%s3] sm:$0x1]
      %v541 = vlaneseq
      %v542 = vshrl.u32 %v541, 7
      %v543 = vsub.s32 0, %v542
      %v544 = vrot.slane %v539, %v543
      %v546 = vadd.f32 %v531, %v544
      %v547 = vadd.f32 %v532, %v544
      %v548 = vadd.f32 %v533, %v544
      %v549 = vadd.f32 %v534, %v544
      %v550 = vadd.f32 %v535, %v544
      %v551 = vadd.f32 %v536, %v544
      %v552 = vadd.f32 %v537, %v544
      %v553 = vadd.f32 %v538, %v544
      %v554 = vlaneseq
      %v555 = vshrl.u32 %v554, 7
      %v556 = vsub.s32 0, %v555
      %v557 = vrot.slane %v485, %v556
      %v558 = vmul.f32 %v439, %v557
      %v559 = vmul.f32 %v442, %v557
      %v560 = vmul.f32 %v447, %v557
      %v561 = vmul.f32 %v450, %v557
      %v562 = vmul.f32 %v455, %v557
      %v563 = vmul.f32 %v458, %v557
      %v564 = vmul.f32 %v463, %v557
      %v565 = vmul.f32 %v466, %v557
      %v566 = vlaneseq
      %v567 = vshrl.u32 %v566, 7
      %v568 = vsub.s32 3, %v567
      %v569 = vrot.slane %v485, %v568
      %v570 = vmul.f32 %v447, %v569
      %v571 = vmul.f32 %v450, %v569
      %v572 = vmul.f32 %v455, %v569
      %v573 = vmul.f32 %v458, %v569
      %v574 = vmul.f32 %v463, %v569
      %v575 = vmul.f32 %v466, %v569
      %v576 = vmul.f32 %v471, %v569
      %v577 = vmul.f32 %v474, %v569
      %v578 = vadd.f32 %v558, %v570
      %v579 = vadd.f32 %v559, %v571
      %v580 = vadd.f32 %v560, %v572
      %v581 = vadd.f32 %v561, %v573
      %v582 = vadd.f32 %v562, %v574
      %v583 = vadd.f32 %v563, %v575
      %v584 = vadd.f32 %v564, %v576
      %v585 = vadd.f32 %v565, %v577
      %v586 = vlaneseq
      %v587 = vshrl.u32 %v586, 7
      %v588 = vsub.s32 6, %v587
      %v589 = vrot.slane %v485, %v588
      %v590 = vmul.f32 %v455, %v589
      %v591 = vmul.f32 %v458, %v589
      %v592 = vmul.f32 %v463, %v589
      %v593 = vmul.f32 %v466, %v589
      %v594 = vmul.f32 %v471, %v589
      %v595 = vmul.f32 %v474, %v589
      %v596 = vmul.f32 %v479, %v589
      %v597 = vmul.f32 %v482, %v589
      %v598 = vadd.f32 %v578, %v590
      %v599 = vadd.f32 %v579, %v591
      %v600 = vadd.f32 %v580, %v592
      %v601 = vadd.f32 %v581, %v593
      %v602 = vadd.f32 %v582, %v594
      %v603 = vadd.f32 %v583, %v595
      %v604 = vadd.f32 %v584, %v596
      %v605 = vadd.f32 %v585, %v597
      %v606 = vrot.slane %v598, 7
      %v607 = vrot.slane %v599, 7
      %v608 = vrot.slane %v600, 7
      %v609 = vrot.slane %v601, 7
      %v610 = vrot.slane %v602, 7
      %v611 = vrot.slane %v603, 7
      %v612 = vrot.slane %v604, 7
      %v613 = vrot.slane %v605, 7
      %v614 = vlaneseq
      %v615 = vshrl.u32 %v614, 7
      %vm616 = vcmp.lt.s32.totalorder %v615, 1
      %v617 = vsel %vm616, %v612, %v613
      %v618 = vsel %vm616, %v611, %v612
      %v619 = vsel %vm616, %v610, %v611
      %v620 = vsel %vm616, %v609, %v610
      %v621 = vsel %vm616, %v608, %v609
      %v622 = vsel %vm616, %v607, %v608
      %v623 = vsel %vm616, %v606, %v607
      %v624 = vsel %vm616, %v613, %v606
      %v625 = vld [vmem:[%s6] sm:$0xff]
      %v626 = vld [vmem:[%s6 + $0x8] sm:$0xff]
      %v627 = vld [vmem:[%s6 + $0x10] sm:$0xff]
      %v628 = vld [vmem:[%s6 + $0x18] sm:$0xff]
      %v629 = vld [vmem:[%s6 + $0x20] sm:$0xff]
      %v630 = vld [vmem:[%s6 + $0x28] sm:$0xff]
      %v631 = vld [vmem:[%s6 + $0x30] sm:$0xff]
      %v632 = vld [vmem:[%s6 + $0x38] sm:$0xff]
      %634 = vset.pattern.permute.xlu0 0
      %635 = vperm.xlu0 %634, %v625
      %v636 = vpop.permute.xlu0 %635
      %639 = vset.pattern.permute.xlu0 0
      %640 = vperm.xlu0 %639, %v626
      %v641 = vpop.permute.xlu0 %640
      %644 = vset.pattern.permute.xlu0 0
      %645 = vperm.xlu0 %644, %v627
      %v646 = vpop.permute.xlu0 %645
      %649 = vset.pattern.permute.xlu0 0
      %650 = vperm.xlu0 %649, %v628
      %v651 = vpop.permute.xlu0 %650
      %654 = vset.pattern.permute.xlu0 0
      %655 = vperm.xlu0 %654, %v629
      %v656 = vpop.permute.xlu0 %655
      %659 = vset.pattern.permute.xlu0 0
      %660 = vperm.xlu0 %659, %v630
      %v661 = vpop.permute.xlu0 %660
      %664 = vset.pattern.permute.xlu0 0
      %665 = vperm.xlu0 %664, %v631
      %v666 = vpop.permute.xlu0 %665
      %669 = vset.pattern.permute.xlu0 0
      %670 = vperm.xlu0 %669, %v632
      %v671 = vpop.permute.xlu0 %670
      %v673 = vmul.f32 %v624, %v636
      %v674 = vmul.f32 %v623, %v641
      %v675 = vmul.f32 %v622, %v646
      %v676 = vmul.f32 %v621, %v651
      %v677 = vmul.f32 %v620, %v656
      %v678 = vmul.f32 %v619, %v661
      %v679 = vmul.f32 %v618, %v666
      %v680 = vmul.f32 %v617, %v671
      %v681 = vadd.f32 %v546, %v673
      %v682 = vadd.f32 %v547, %v674
      %v683 = vadd.f32 %v548, %v675
      %v684 = vadd.f32 %v549, %v676
      %v685 = vadd.f32 %v550, %v677
      %v686 = vadd.f32 %v551, %v678
      %v687 = vadd.f32 %v552, %v679
      %v688 = vadd.f32 %v553, %v680
      %v689 = vlaneseq
      %v690 = vshrl.u32 %v689, 7
      %v691 = vsub.s32 2, %v690
      %v692 = vrot.slane %v485, %v691
      %v693 = vmul.f32 %v439, %v692
      %v694 = vmul.f32 %v442, %v692
      %v695 = vmul.f32 %v447, %v692
      %v696 = vmul.f32 %v450, %v692
      %v697 = vmul.f32 %v455, %v692
      %v698 = vmul.f32 %v458, %v692
      %v699 = vmul.f32 %v463, %v692
      %v700 = vmul.f32 %v466, %v692
      %v701 = vlaneseq
      %v702 = vshrl.u32 %v701, 7
      %v703 = vsub.s32 5, %v702
      %v704 = vrot.slane %v485, %v703
      %v705 = vmul.f32 %v447, %v704
      %v706 = vmul.f32 %v450, %v704
      %v707 = vmul.f32 %v455, %v704
      %v708 = vmul.f32 %v458, %v704
      %v709 = vmul.f32 %v463, %v704
      %v710 = vmul.f32 %v466, %v704
      %v711 = vmul.f32 %v471, %v704
      %v712 = vmul.f32 %v474, %v704
      %v713 = vadd.f32 %v693, %v705
      %v714 = vadd.f32 %v694, %v706
      %v715 = vadd.f32 %v695, %v707
      %v716 = vadd.f32 %v696, %v708
      %v717 = vadd.f32 %v697, %v709
      %v718 = vadd.f32 %v698, %v710
      %v719 = vadd.f32 %v699, %v711
      %v720 = vadd.f32 %v700, %v712
      %v721 = vlaneseq
      %v722 = vshrl.u32 %v721, 7
      %v723 = vsub.s32 0, %v722
      %v724 = vrot.slane %v486, %v723
      %v725 = vmul.f32 %v455, %v724
      %v726 = vmul.f32 %v458, %v724
      %v727 = vmul.f32 %v463, %v724
      %v728 = vmul.f32 %v466, %v724
      %v729 = vmul.f32 %v471, %v724
      %v730 = vmul.f32 %v474, %v724
      %v731 = vmul.f32 %v479, %v724
      %v732 = vmul.f32 %v482, %v724
      %v733 = vadd.f32 %v713, %v725
      %v734 = vadd.f32 %v714, %v726
      %v735 = vadd.f32 %v715, %v727
      %v736 = vadd.f32 %v716, %v728
      %v737 = vadd.f32 %v717, %v729
      %v738 = vadd.f32 %v718, %v730
      %v739 = vadd.f32 %v719, %v731
      %v740 = vadd.f32 %v720, %v732
      %v741 = vrot.slane %v733, 1
      %v742 = vrot.slane %v734, 1
      %v743 = vrot.slane %v735, 1
      %v744 = vrot.slane %v736, 1
      %v745 = vrot.slane %v737, 1
      %v746 = vrot.slane %v738, 1
      %v747 = vrot.slane %v739, 1
      %v748 = vrot.slane %v740, 1
      %vm749 = vcmp.lt.s32.totalorder %v615, 7
      %v750 = vsel %vm749, %v747, %v748
      %v751 = vsel %vm749, %v746, %v747
      %v752 = vsel %vm749, %v745, %v746
      %v753 = vsel %vm749, %v744, %v745
      %v754 = vsel %vm749, %v743, %v744
      %v755 = vsel %vm749, %v742, %v743
      %v756 = vsel %vm749, %v741, %v742
      %v757 = vsel %vm749, %v748, %v741
      %v758 = vld [vmem:[%s7] sm:$0xff]
      %v759 = vld [vmem:[%s7 + $0x8] sm:$0xff]
      %v760 = vld [vmem:[%s7 + $0x10] sm:$0xff]
      %v761 = vld [vmem:[%s7 + $0x18] sm:$0xff]
      %v762 = vld [vmem:[%s7 + $0x20] sm:$0xff]
      %v763 = vld [vmem:[%s7 + $0x28] sm:$0xff]
      %v764 = vld [vmem:[%s7 + $0x30] sm:$0xff]
      %v765 = vld [vmem:[%s7 + $0x38] sm:$0xff]
      %767 = vset.pattern.permute.xlu0 0
      %768 = vperm.xlu0 %767, %v758
      %v769 = vpop.permute.xlu0 %768
      %772 = vset.pattern.permute.xlu0 0
      %773 = vperm.xlu0 %772, %v759
      %v774 = vpop.permute.xlu0 %773
      %777 = vset.pattern.permute.xlu0 0
      %778 = vperm.xlu0 %777, %v760
      %v779 = vpop.permute.xlu0 %778
      %782 = vset.pattern.permute.xlu0 0
      %783 = vperm.xlu0 %782, %v761
      %v784 = vpop.permute.xlu0 %783
      %787 = vset.pattern.permute.xlu0 0
      %788 = vperm.xlu0 %787, %v762
      %v789 = vpop.permute.xlu0 %788
      %792 = vset.pattern.permute.xlu0 0
      %793 = vperm.xlu0 %792, %v763
      %v794 = vpop.permute.xlu0 %793
      %797 = vset.pattern.permute.xlu0 0
      %798 = vperm.xlu0 %797, %v764
      %v799 = vpop.permute.xlu0 %798
      %802 = vset.pattern.permute.xlu0 0
      %803 = vperm.xlu0 %802, %v765
      %v804 = vpop.permute.xlu0 %803
      %v806 = vmul.f32 %v756, %v769
      %v807 = vmul.f32 %v755, %v774
      %v808 = vmul.f32 %v754, %v779
      %v809 = vmul.f32 %v753, %v784
      %v810 = vmul.f32 %v752, %v789
      %v811 = vmul.f32 %v751, %v794
      %v812 = vmul.f32 %v750, %v799
      %v813 = vmul.f32 %v757, %v804
      %v814 = vadd.f32 %v681, %v806
      %v815 = vadd.f32 %v682, %v807
      %v816 = vadd.f32 %v683, %v808
      %v817 = vadd.f32 %v684, %v809
      %v818 = vadd.f32 %v685, %v810
      %v819 = vadd.f32 %v686, %v811
      %v820 = vadd.f32 %v687, %v812
      %v821 = vadd.f32 %v688, %v813
      %v822 = vmul.f32 %v814, 0.5
      %v823 = vmul.f32 %v815, 0.5
      %v824 = vmul.f32 %v816, 0.5
      %v825 = vmul.f32 %v817, 0.5
      %v826 = vmul.f32 %v818, 0.5
      %v827 = vmul.f32 %v819, 0.5
      %v828 = vmul.f32 %v820, 0.5
      %v829 = vmul.f32 %v821, 0.5
      %v830 = vmul.f32 %v814, 0.70710677
      %v831 = vmul.f32 %v815, 0.70710677
      %v832 = vmul.f32 %v816, 0.70710677
      %v833 = vmul.f32 %v817, 0.70710677
      %v834 = vmul.f32 %v818, 0.70710677
      %v835 = vmul.f32 %v819, 0.70710677
      %v836 = vmul.f32 %v820, 0.70710677
      %v837 = vmul.f32 %v821, 0.70710677
      %v838 = verf.f32.pop %v830
      %v839 = verf.f32.pop %v831
      %v840 = verf.f32.pop %v832
      %v841 = verf.f32.pop %v833
      %v842 = verf.f32.pop %v834
      %v843 = verf.f32.pop %v835
      %v844 = verf.f32.pop %v836
      %v845 = verf.f32.pop %v837
      %v846 = vadd.f32 %v838, 1.0
      %v847 = vadd.f32 %v839, 1.0
      %v848 = vadd.f32 %v840, 1.0
      %v849 = vadd.f32 %v841, 1.0
      %v850 = vadd.f32 %v842, 1.0
      %v851 = vadd.f32 %v843, 1.0
      %v852 = vadd.f32 %v844, 1.0
      %v853 = vadd.f32 %v845, 1.0
      %v854 = vmul.f32 %v822, %v846
      %v855 = vmul.f32 %v823, %v847
      %v856 = vmul.f32 %v824, %v848
      %v857 = vmul.f32 %v825, %v849
      %v858 = vmul.f32 %v826, %v850
      %v859 = vmul.f32 %v827, %v851
      %v860 = vmul.f32 %v828, %v852
      %v861 = vmul.f32 %v829, %v853
      %v862 = vpack.c.bf16 %v855, %v854
      %v863 = vpack.c.bf16 %v857, %v856
      %v864 = vpack.c.bf16 %v859, %v858
      %v865 = vpack.c.bf16 %v861, %v860
      %v866 = vld [vmem:[%s4] sm:$0xf]
      %v867 = vld [vmem:[%s4 + $0x4] sm:$0xf]
      %v868 = vld [vmem:[%s4 + $0x8] sm:$0xf]
      %v869 = vld [vmem:[%s4 + $0xc] sm:$0xf]
      %v870 = vld [vmem:[%s4 + $0x10] sm:$0xf]
      %v871 = vld [vmem:[%s4 + $0x14] sm:$0xf]
      %v872 = vld [vmem:[%s4 + $0x18] sm:$0xf]
      %v873 = vld [vmem:[%s4 + $0x1c] sm:$0xf]
      %v874 = vld [vmem:[%s4 + $0x20] sm:$0xf]
      %v875 = vld [vmem:[%s4 + $0x24] sm:$0xf]
      %v876 = vld [vmem:[%s4 + $0x28] sm:$0xf]
      %v877 = vld [vmem:[%s4 + $0x2c] sm:$0xf]
      %v878 = vld [vmem:[%s4 + $0x30] sm:$0xf]
      %v879 = vld [vmem:[%s4 + $0x34] sm:$0xf]
      %v880 = vld [vmem:[%s4 + $0x38] sm:$0xf]
      %v881 = vld [vmem:[%s4 + $0x3c] sm:$0xf]
      %v882 = vld [vmem:[%s5] sm:$0x1]
      %v884 = vlaneseq
      %v885 = vshrl.u32 %v884, 7
      %v886 = vsub.s32 0, %v885
      %v887 = vrot.slane %v882, %v886
      %v905 = vunpack.c.l.b16 %v866
      %v906 = vunpack.c.l.b16 %v867
      %v907 = vunpack.c.l.b16 %v868
      %v908 = vunpack.c.l.b16 %v869
      %v909 = vunpack.c.l.b16 %v870
      %v910 = vunpack.c.l.b16 %v871
      %v911 = vunpack.c.l.b16 %v872
      %v912 = vunpack.c.l.b16 %v873
      %v913 = vunpack.c.l.b16 %v874
      %v914 = vunpack.c.l.b16 %v875
      %v915 = vunpack.c.l.b16 %v876
      %v916 = vunpack.c.l.b16 %v877
      %v917 = vunpack.c.l.b16 %v878
      %v918 = vunpack.c.l.b16 %v879
      %v919 = vunpack.c.l.b16 %v880
      %v920 = vunpack.c.l.b16 %v881
      %v921 = vpack.c.b16 %v906, %v905
      %v922 = vpack.c.b16 %v908, %v907
      %v923 = vpack.c.b16 %v910, %v909
      %v924 = vpack.c.b16 %v912, %v911
      %v925 = vpack.c.b16 %v914, %v913
      %v926 = vpack.c.b16 %v916, %v915
      %v927 = vpack.c.b16 %v918, %v917
      %v928 = vpack.c.b16 %v920, %v919
      %937 = vmatprep.subr.bf16.mxu0 0
      %938 = vmatpush1.bf16.msra.mxu0 %v928
      %939 = vmatprep.subr.bf16.mxu0 0
      %940 = vmatpush1.bf16.msra.mxu0 %v927
      %941 = vmatprep.subr.bf16.mxu0 0
      %942 = vmatpush1.bf16.msra.mxu0 %v926
      %943 = vmatprep.subr.bf16.mxu0 0
      %944 = vmatpush1.bf16.msra.mxu0 %v925
      %945 = vmatprep.subr.bf16.mxu0 0
      %946 = vmatpush1.bf16.msra.mxu0 %v924
      %947 = vmatprep.subr.bf16.mxu0 0
      %948 = vmatpush1.bf16.msra.mxu0 %v923
      %949 = vmatprep.subr.bf16.mxu0 0
      %950 = vmatpush1.bf16.msra.mxu0 %v922
      %951 = vmatprep.subr.bf16.mxu0 0
      %952 = vmatpush1.bf16.msra.mxu0 %v921
      %953 = vmatprep.subr.bf16.mxu0 0
      %954 = vmatpush2.bf16.msra.mxu0 0
      %955 = vmatprep.subr.bf16.mxu0 0
      %956 = vmatpush2.bf16.msra.mxu0 0
      %957 = vmatprep.subr.bf16.mxu0 0
      %958 = vmatpush2.bf16.msra.mxu0 0
      %959 = vmatprep.subr.bf16.mxu0 0
      %960 = vmatpush2.bf16.msra.mxu0 0
      %961 = vmatprep.subr.bf16.mxu0 0
      %962 = vmatpush2.bf16.msra.mxu0 0
      %963 = vmatprep.subr.bf16.mxu0 0
      %964 = vmatpush2.bf16.msra.mxu0 0
      %965 = vmatprep.subr.bf16.mxu0 0
      %966 = vmatpush2.bf16.msra.mxu0 0
      %967 = vmatprep.subr.bf16.mxu0 0
      %968 = vmatpush2.bf16.msra.mxu0 0
      %969 = vmatprep.mubr.bf16.mxu0 0
      %970 = vmatmul.mubr.bf16.gmra.mxu0 %v862
      %v971 = vpop.f32.mrf.mxu0
      %v972 = vadd.f32 %v887, %v971
      %v973 = vpop.f32.mrf.mxu0
      %v974 = vpop.f32.mrf.mxu0
      %v975 = vadd.f32 %v887, %v974
      %v976 = vpop.f32.mrf.mxu0
      %977 = vmatprep.mubr.bf16.mxu0 0
      %978 = vmatmul.mubr.bf16.gmra.mxu0 %v863
      %v979 = vpop.f32.mrf.mxu0
      %v980 = vadd.f32 %v887, %v979
      %v981 = vpop.f32.mrf.mxu0
      %v982 = vpop.f32.mrf.mxu0
      %v983 = vadd.f32 %v887, %v982
      %v984 = vpop.f32.mrf.mxu0
      %985 = vmatprep.mubr.bf16.mxu0 0
      %986 = vmatmul.mubr.bf16.gmra.mxu0 %v864
      %v987 = vpop.f32.mrf.mxu0
      %v988 = vadd.f32 %v887, %v987
      %v989 = vpop.f32.mrf.mxu0
      %v990 = vpop.f32.mrf.mxu0
      %v991 = vadd.f32 %v887, %v990
      %v992 = vpop.f32.mrf.mxu0
      %993 = vmatprep.mubr.bf16.mxu0 0
      %994 = vmatmul.mubr.bf16.gmra.mxu0 %v865
      %v995 = vpop.f32.mrf.mxu0
      %v996 = vadd.f32 %v887, %v995
      %v997 = vpop.f32.mrf.mxu0
      %v998 = vpop.f32.mrf.mxu0
      %v999 = vadd.f32 %v887, %v998
      %v1000 = vpop.f32.mrf.mxu0
      %1001 = vdwg.mxu0
      %vm1002 = vcmask 31744
      %1003 = vst.msk [vmem:[%s327] sm:$0xff] %vm1002, %v972
      %1004 = vst.msk [vmem:[%s327 + $0x8] sm:$0xff] %vm1002, %v975
      %1005 = vst.msk [vmem:[%s327 + $0x10] sm:$0xff] %vm1002, %v980
      %1006 = vst.msk [vmem:[%s327 + $0x18] sm:$0xff] %vm1002, %v983
      %1007 = vst.msk [vmem:[%s327 + $0x20] sm:$0xff] %vm1002, %v988
      %1008 = vst.msk [vmem:[%s327 + $0x28] sm:$0xff] %vm1002, %v991
      %1009 = vst.msk [vmem:[%s327 + $0x30] sm:$0xff] %vm1002, %v996
      %1010 = vst.msk [vmem:[%s327 + $0x38] sm:$0xff] %vm1002, %v999
      %s1011 = smul.u32 8, %s24
      %p1012 = scmp.lt.s32.totalorder %s23, 1
      %s1013 = scalar_select %p1012, %s23, 1
      %p1014 = scmp.lt.s32.totalorder %s1011, 31
      %s1015 = scalar_select %p1014, %s1011, 31
      %s1016 = smul.addr %s1013, 32
      %s1017 = sadd.s32 %s1015, %s1016
      %s1018 = smul.addr %s1017, 8
      %s1019 = scalar_lea.vmem %s8, %s1018
      // Predicated region
      $region53: #{tpu_custom_call.1} parent=51 // pred_check
        %p1020 = pneg %p224
      $region54: #{tpu_custom_call.1} parent=51 // pred_check_branch
        %1022 = sbr.rel (%p1020) target = $region56
      $region55: #{tpu_custom_call.1} parent=51 // pred_region
        %s1023 = smul.u32 8, %s24
      $region56: #{tpu_custom_call.1} parent=51 // pred_fallthru
        _
    $region52: #{tpu_custom_call.1} parent=5 // pred_fallthru
      _
    %p1024 = scmp.le.s32.totalorder 2, %s14
    // Predicated region
    $region57: #{tpu_custom_call.1} parent=5 // pred_check
      %p1025 = pneg %p1024
    $region58: #{tpu_custom_call.1} parent=5 // pred_check_branch
      %1027 = sbr.rel (%p1025) target = $region60
    $region59: #{tpu_custom_call.1} parent=5 // pred_region
      %s1028 = ssub.s32 %s14, 2
      // Predicated region
      $region61: #{tpu_custom_call.1} parent=59 // pred_check
        %p1029 = pneg %p230
      $region62: #{tpu_custom_call.1} parent=59 // pred_check_branch
        %1031 = sbr.rel (%p1029) target = $region64
      $region63: #{tpu_custom_call.1} parent=59 // pred_region
        %s1032 = smul.u32 8, %s26
        %p1033 = scmp.lt.s32.totalorder %s25, 1
        %s1034 = scalar_select %p1033, %s25, 1
        %p1035 = scmp.lt.s32.totalorder %s1032, 31
        %s1036 = scalar_select %p1035, %s1032, 31
        %s1037 = smul.addr %s1034, 32
        %s1038 = sadd.s32 %s1036, %s1037
        %s1039 = smul.addr %s1038, 8
        %s1040 = scalar_lea.vmem %s8, %s1039
      $region64: #{tpu_custom_call.1} parent=59 // pred_fallthru
        _
    $region60: #{tpu_custom_call.1} parent=5 // pred_fallthru
      _
  $region6: #{tpu_custom_call.1} parent=0 // loop_footer
    %s18 = sadd.s32 1, %s14
  $region7: #{tpu_custom_call.1} parent=0 // loop_footer_branch
    %13 = sbr.rel target = $region3
  $region8: #{tpu_custom_call.1} parent=0 // loop_exit
    _

</llo_original>
